<compile_context>
chip_gen: v5e
topology: v5e:2x2
jax: 0.10.0
libtpu: 0.0.40
codegen_flags: <defaults>
</compile_context>

<pallas_src>
import jax
import jax.numpy as jnp
from jax import lax
from jax.experimental import pallas as pl
from jax.experimental.pallas import tpu as pltpu


def _round_up(x, m):
    return (x + m - 1) // m * m


def _make_kernel(*, M, D, tk, emb_resident, ragged_k, compute_dtype):
    """Builds the AvgReadout kernel body with the static config baked in."""

    def kernel(mask_ref, emb_ref, out_ref):
        k = pl.program_id(1)
        nk = pl.num_programs(1)

        # The output block index is constant along k, so it stays VMEM-resident
        # across the whole reduction and doubles as the f32 accumulator.
        @pl.when(k == 0)
        def _init():
            out_ref[...] = jnp.zeros_like(out_ref)

        m = mask_ref[...]                                  # (tn, tk) native dtype
        if ragged_k:
            # Zero the out-of-bounds K columns of the clamped last tile so the
            # unspecified data never reaches the accumulator / ones-column sum.
            cols = k * tk + lax.broadcasted_iota(jnp.int32, m.shape, 1)
            m = jnp.where(cols < M, m, jnp.zeros_like(m))
        if compute_dtype is not None and m.dtype != compute_dtype:
            m = m.astype(compute_dtype)                    # per-tile cast, hides under DMA

        if emb_resident:
            # emb is a single VMEM-resident block; slice the K window in-kernel.
            start = pl.multiple_of(k * tk, tk)
            e = emb_ref[pl.ds(start, tk), :]
        else:
            e = emb_ref[...]

        # MXU matmul, f32 accumulate straight into the resident output block.
        out_ref[...] += jnp.dot(m, e, preferred_element_type=jnp.float32)

        @pl.when(k == nk - 1)
        def _finalize():
            acc = out_ref[...]                             # (tn, d_pad) f32
            lane = lax.broadcasted_iota(jnp.int32, acc.shape, 1)
            # Row sums came along for free via the ones column at lane D.
            rowsum = jnp.sum(jnp.where(lane == D, acc, 0.0), axis=1, keepdims=True)
            # Sign-preserving epsilon guard: all-zero mask rows give 0 instead of
            # torch's NaN.  Any positive per-row scale error here cancels under
            # the L2 norm, so the approximate EUP reciprocal is exact in effect.
            safe = jnp.where(rowsum < 0.0,
                             jnp.minimum(rowsum, -1e-12),
                             jnp.maximum(rowsum, 1e-12))
            g = jnp.where(lane < D, acc, 0.0) * pl.reciprocal(safe, approx=True)
            # F.normalize(g, p=2, dim=1) == g * rsqrt(max(sum(g^2), eps^2))
            sumsq = jnp.sum(g * g, axis=1, keepdims=True)
            out_ref[...] = (g * lax.rsqrt(jnp.maximum(sumsq, 1e-24))).astype(out_ref.dtype)

    return kernel


def avg_readout(emb, mask, *, compute_dtype=None, tn_max=512, tk_max=512,
                resident_emb_bytes=20 << 20):
    """Pallas TPU AvgReadout.  emb: (M, D), mask: (N, M) -> (N, D) float32."""
    M, D = emb.shape
    N, M2 = mask.shape
    assert M == M2, "mask cols must match emb rows"

    # ---- tile selection --------------------------------------------------
    # N is the "parallel" grid axis.  Prefer multiples of 128 (full MXU rows on
    # v5e) and keep >= 2 blocks when N allows so v7x megacore uses both TCs.
    if N <= 128:
        tn = _round_up(N, 8)
    else:
        tn = max(128, min(tn_max, _round_up(-(-N // 2), 128)))
    ni = pl.cdiv(N, tn)

    # K (contraction over M) is the innermost "arbitrary" reduction axis.
    if M <= 128:
        tk = M                     # block dim == full array dim is always legal
    else:
        tk = min(tk_max, _round_up(M, 128))
        # Prefer a multiple-of-128 divisor of M so no ragged-tile masking is needed.
        for cand in range(tk, 127, -128):
            if M % cand == 0:
                tk = cand
                break
    nk = pl.cdiv(M, tk)
    ragged_k = (M % tk) != 0

    # Lane-dense output; one extra lane (index D) reserved for the ones column.
    d_pad = _round_up(D + 1, 128)
    m_rows = nk * tk

    # ---- emb prep (cheap: emb is tiny next to the (N, M) mask stream) -----
    emb_dtype = compute_dtype if compute_dtype is not None else emb.dtype
    emb_p = jnp.zeros((m_rows, d_pad), emb_dtype)
    emb_p = emb_p.at[:M, :D].set(emb.astype(emb_dtype))
    emb_p = emb_p.at[:M, D].set(jnp.asarray(1.0, emb_dtype))  # row sums via the MXU

    mask_itemsize = jnp.dtype(mask.dtype).itemsize
    emb_itemsize = jnp.dtype(emb_dtype).itemsize

    emb_bytes = m_rows * d_pad * emb_itemsize
    emb_resident = emb_bytes <= resident_emb_bytes
    if emb_resident:
        emb_spec = pl.BlockSpec((m_rows, d_pad), lambda i, k: (0, 0))
        emb_block_bytes = emb_bytes
    else:
        emb_spec = pl.BlockSpec((tk, d_pad), lambda i, k: (k, 0))
        emb_block_bytes = tk * d_pad * emb_itemsize

    kernel = _make_kernel(M=M, D=D, tk=tk, emb_resident=emb_resident,
                          ragged_k=ragged_k, compute_dtype=compute_dtype)

    # VMEM budget: double-buffered mask/emb/out blocks + margin; safe on v7x (64 MiB).
    vmem_bytes = (2 * tn * tk * mask_itemsize
                  + 2 * emb_block_bytes
                  + 2 * tn * d_pad * 4
                  + (4 << 20))
    vmem_bytes = int(min(max(vmem_bytes, 16 << 20), 50 << 20))

    out_pad = pl.pallas_call(
        kernel,
        out_shape=jax.ShapeDtypeStruct((N, d_pad), jnp.float32),
        grid_spec=pltpu.PrefetchScalarGridSpec(
            num_scalar_prefetch=0,
            grid=(ni, nk),
            in_specs=[
                pl.BlockSpec((tn, tk), lambda i, k: (i, k)),   # mask tile (streamed, un-padded)
                emb_spec,                                      # emb (VMEM-resident or streamed)
            ],
            out_specs=pl.BlockSpec((tn, d_pad), lambda i, k: (i, 0)),
        ),
        compiler_params=pltpu.CompilerParams(
            dimension_semantics=("parallel", "arbitrary"),
            vmem_limit_bytes=vmem_bytes,
        ),
    )(mask, emb_p)

    return out_pad[:, :D]


def avg_readout_ref(emb, mask):
    vsum = mask @ emb
    row_sum = jnp.sum(mask, axis=1, keepdims=True)
    g = vsum / row_sum
    norm = jnp.maximum(jnp.linalg.norm(g, axis=1, keepdims=True), 1e-12)
    return g / norm


if __name__ == "__main__":
    key = jax.random.PRNGKey(0)
    k1, k2 = jax.random.split(key)

    N, M, D = 8, 16, 32  # N graphs/regions, M nodes, D hidden
    # Non-negative mask with nonzero row sums (typical assignment/adjacency mask).
    mask = jax.random.uniform(k1, (N, M), dtype=jnp.float32) + 0.1
    emb = jax.random.normal(k2, (M, D), dtype=jnp.float32)

    out = avg_readout(emb, mask)
    out = jax.block_until_ready(out)
    ref = avg_readout_ref(emb, mask)

    assert out.shape == (N, D)
    assert bool(jnp.all(jnp.isfinite(out)))
    assert jnp.allclose(out, ref, atol=5e-3, rtol=5e-3), (
        f"mismatch vs reference, max abs err {float(jnp.max(jnp.abs(out - ref)))}")

    print("KERNEL_OK")
</pallas_src>

<mosaic_0001>
module attributes {stable_mosaic.version = 11 : i64} {
  func.func @kernel(%arg0: i32, %arg1: i32, %arg2: memref<8x16xf32, #tpu.memory_space<vmem>>, %arg3: memref<16x128xf32, #tpu.memory_space<vmem>>, %arg4: memref<8x128xf32, #tpu.memory_space<vmem>>) attributes {dimension_semantics = [#tpu.dimension_semantics<parallel>, #tpu.dimension_semantics<arbitrary>], iteration_bounds = array<i64: 1, 1>, scalar_prefetch = 0 : i64, scratch_operands = 0 : i64, tpu.core_type = #tpu.core_type<tc>, window_params = [{transform_indices = @transform_0, window_bounds = array<i64: 8, 16>}, {pipeline_mode = #tpu.pipeline_mode<synchronous>, transform_indices = @transform_1, window_bounds = array<i64: 16, 128>}, {transform_indices = @transform_2, window_bounds = array<i64: 8, 128>}]} {
    %c0_i32 = arith.constant 0 : i32
    %0 = arith.cmpi eq, %arg1, %c0_i32 : i32
    %1 = arith.extui %0 : i1 to i32
    %c0_i32_0 = arith.constant 0 : i32
    %2 = arith.cmpi ne, %1, %c0_i32_0 : i32
    scf.if %2 {
      %cst_9 = arith.constant 0.000000e+00 : f32
      %15 = vector.broadcast %cst_9 : f32 to vector<8x128xf32>
      %c0_10 = arith.constant 0 : index
      %c0_11 = arith.constant 0 : index
      %16 = vector.load %arg4[%c0_10, %c0_11] : memref<8x128xf32, #tpu.memory_space<vmem>>, vector<8x128xf32>
      tpu.vector_store %arg4[%c0_10, %c0_11], %15 {strides = array<i32>} : memref<8x128xf32, #tpu.memory_space<vmem>>, vector<8x128xf32>,
    } else {
    }
    %c0 = arith.constant 0 : index
    %c0_1 = arith.constant 0 : index
    %3 = vector.load %arg2[%c0, %c0_1] : memref<8x16xf32, #tpu.memory_space<vmem>>, vector<8x16xf32>
    %c16_i32 = arith.constant 16 : i32
    %4 = arith.muli %arg1, %c16_i32 : i32
    %5 = tpu.assume_multiple %4, 16 : i32
    %6 = arith.index_cast %5 : i32 to index
    %c0_2 = arith.constant 0 : index
    %7 = vector.load %arg3[%6, %c0_2] : memref<16x128xf32, #tpu.memory_space<vmem>>, vector<16x128xf32>
    %c0_3 = arith.constant 0 : index
    %c0_4 = arith.constant 0 : index
    %8 = vector.load %arg4[%c0_3, %c0_4] : memref<8x128xf32, #tpu.memory_space<vmem>>, vector<8x128xf32>
    %cst = arith.constant dense<0.000000e+00> : vector<8x128xf32>
    %9 = tpu.matmul %3, %7, %cst {dimension_numbers = #tpu.dot_dimension_numbers<[1], [0], [0], [1], [0, 0, 1, 1], [], []>} : vector<8x16xf32>, vector<16x128xf32>, vector<8x128xf32> -> vector<8x128xf32>
    %10 = arith.addf %8, %9 : vector<8x128xf32>
    %c0_5 = arith.constant 0 : index
    %c0_6 = arith.constant 0 : index
    %11 = vector.load %arg4[%c0_5, %c0_6] : memref<8x128xf32, #tpu.memory_space<vmem>>, vector<8x128xf32>
    tpu.vector_store %arg4[%c0_5, %c0_6], %10 {strides = array<i32>} : memref<8x128xf32, #tpu.memory_space<vmem>>, vector<8x128xf32>,
    %c0_i32_7 = arith.constant 0 : i32
    %12 = arith.cmpi eq, %arg1, %c0_i32_7 : i32
    %13 = arith.extui %12 : i1 to i32
    %c0_i32_8 = arith.constant 0 : i32
    %14 = arith.cmpi ne, %13, %c0_i32_8 : i32
    scf.if %14 {
      %c0_9 = arith.constant 0 : index
      %c0_10 = arith.constant 0 : index
      %15 = vector.load %arg4[%c0_9, %c0_10] : memref<8x128xf32, #tpu.memory_space<vmem>>, vector<8x128xf32>
      %16 = tpu.iota {dimensions = array<i32: 1>} : vector<8x128xi32>
      %c32_i32 = arith.constant 32 : i32
      %17 = vector.broadcast %c32_i32 : i32 to vector<8x128xi32>
      %18 = arith.cmpi eq, %16, %17 : vector<8x128xi32>
      %cst_11 = arith.constant 0.000000e+00 : f32
      %19 = vector.broadcast %cst_11 : f32 to vector<8x128xf32>
      %20 = arith.select %18, %15, %19 : vector<8x128xi1>, vector<8x128xf32>
      %cst_12 = arith.constant dense<0.000000e+00> : vector<8xf32>
      %21 = vector.multi_reduction <add>, %20, %cst_12 [1] : vector<8x128xf32> to vector<8xf32>
      %22 = vector.shape_cast %21 : vector<8xf32> to vector<8x1xf32>
      %cst_13 = arith.constant 0.000000e+00 : f32
      %23 = vector.broadcast %cst_13 : f32 to vector<8x1xf32>
      %24 = arith.cmpf olt, %22, %23 : vector<8x1xf32>
      %cst_14 = arith.constant -9.99999996E-13 : f32
      %25 = vector.broadcast %cst_14 : f32 to vector<8x1xf32>
      %26 = arith.minimumf %22, %25 : vector<8x1xf32>
      %cst_15 = arith.constant 9.99999996E-13 : f32
      %27 = vector.broadcast %cst_15 : f32 to vector<8x1xf32>
      %28 = arith.maximumf %22, %27 : vector<8x1xf32>
      %29 = arith.select %24, %26, %28 : vector<8x1xi1>, vector<8x1xf32>
      %c32_i32_16 = arith.constant 32 : i32
      %30 = vector.broadcast %c32_i32_16 : i32 to vector<8x128xi32>
      %31 = arith.cmpi slt, %16, %30 : vector<8x128xi32>
      %cst_17 = arith.constant 0.000000e+00 : f32
      %32 = vector.broadcast %cst_17 : f32 to vector<8x128xf32>
      %33 = arith.select %31, %15, %32 : vector<8x128xi1>, vector<8x128xf32>
      %34 = tpu.reciprocal %29 {approx = true} : vector<8x1xf32> -> vector<8x1xf32>
      %35 = vector.broadcast %34 : vector<8x1xf32> to vector<8x128xf32>
      %36 = arith.mulf %33, %35 : vector<8x128xf32>
      %37 = arith.mulf %36, %36 : vector<8x128xf32>
      %cst_18 = arith.constant dense<0.000000e+00> : vector<8xf32>
      %38 = vector.multi_reduction <add>, %37, %cst_18 [1] : vector<8x128xf32> to vector<8xf32>
      %39 = vector.shape_cast %38 : vector<8xf32> to vector<8x1xf32>
      %cst_19 = arith.constant 1.000000e-24 : f32
      %40 = vector.broadcast %cst_19 : f32 to vector<8x1xf32>
      %41 = arith.maximumf %39, %40 : vector<8x1xf32>
      %42 = math.rsqrt %41 : vector<8x1xf32>
      %43 = vector.broadcast %42 : vector<8x1xf32> to vector<8x128xf32>
      %44 = arith.mulf %36, %43 : vector<8x128xf32>
      %c0_20 = arith.constant 0 : index
      %c0_21 = arith.constant 0 : index
      %45 = vector.load %arg4[%c0_20, %c0_21] : memref<8x128xf32, #tpu.memory_space<vmem>>, vector<8x128xf32>
      tpu.vector_store %arg4[%c0_20, %c0_21], %44 {strides = array<i32>} : memref<8x128xf32, #tpu.memory_space<vmem>>, vector<8x128xf32>,
    } else {
    }
    return
  }
  func.func @transform_0(%arg0: i32, %arg1: i32) -> (i32, i32) {
    %c0_i32 = arith.constant 0 : i32
    return %arg0, %arg1 : i32, i32
  }
  func.func @transform_1(%arg0: i32, %arg1: i32) -> (i32, i32) {
    %c0_i32 = arith.constant 0 : i32
    %c0_i32_0 = arith.constant 0 : i32
    %c0_i32_1 = arith.constant 0 : i32
    return %c0_i32, %c0_i32_0 : i32, i32
  }
  func.func @transform_2(%arg0: i32, %arg1: i32) -> (i32, i32) {
    %c0_i32 = arith.constant 0 : i32
    %c0_i32_0 = arith.constant 0 : i32
    return %arg0, %c0_i32 : i32, i32
  }
}

</mosaic_0001>

<llo_original>
// kernel: tpu_custom_call.1
$region0: #{tpu_custom_call.1}
  #allocation0 [shape = 'u32[]', space=smem, size = 0x4, offset = 0x4, fixed_abs, tag = 'smem constant byte address 0x4 - core index']
  #allocation1 [shape = 'u32[72,128]{1,0:T(1,128)}', space=vmem, size = 0x9000, scoped, tag = 'internal scratch']
  %s0 = inlined_call_operand.hbm [shape: f32[8,16], index: 0, kind: input, shape index: {}]
  %s1 = inlined_call_operand.hbm [shape: f32[16,128], index: 1, kind: input, shape index: {}]
  %s2 = inlined_call_operand.hbm [shape: f32[8,128], index: 2, kind: output, shape index: {}]
  %s3 = sld [smem:[#allocation0]]
  $region34: #{tpu_custom_call.1} parent=0
    _
  %s5 = ssub.s32 1, %s3
  %s6 = scalar_select 0, %s5, %s3
  $region1: #{tpu_custom_call.1} parent=0
    #allocation2 [shape = 'u8[4096]{0}', space=vmem, size = 0x1000, scoped, tag = 'input window, operand 0, single buffered']
    #allocation3 [shape = 's32[1]{0}', space=sflag, size = 0x4, scoped, tag = 'scoped memory for tpu_custom_call.1']
    #allocation4 [shape = 's32[1]{0}', space=sflag, size = 0x4, scoped, tag = 'scoped memory for tpu_custom_call.1']
    #allocation5 [shape = 'u8[8192]{0}', space=vmem, size = 0x2000, scoped, tag = 'input window, operand 1, single buffered']
    #allocation6 [shape = 's32[1]{0}', space=sflag, size = 0x4, scoped, tag = 'scoped memory for tpu_custom_call.1']
    #allocation7 [shape = 'u8[4096]{0}', space=vmem, size = 0x1000, scoped, tag = 'output window, operand 0, single buffered']
    %7 = vsyncpa [#allocation3], 0
    %8 = vsyncpa [#allocation6], 0
    %9 = vsyncpa [#allocation4], 0
    // Predicated region
    $region2: #{tpu_custom_call.1} parent=1 // pred_check
      _
    $region3: #{tpu_custom_call.1} parent=1 // pred_check_branch
      %11 = sbr.rel (0) target = $region5
    $region4: #{tpu_custom_call.1} parent=1 // pred_region
      %13 = vsyncadd [#allocation3], 0
      %s15 = sshll.u32 %s0, 4
      %s16 = int_to_ptr.hbm [resolvable:$true] %s15
      %s17 = sshll.u32 [#allocation2], 4
      %s18 = int_to_ptr.vmem [resolvable:$true] %s17
      %20 = dma.hbm_to_vmem [thread:$0]  %s16, 128, %s18, [#allocation3]
    $region5: #{tpu_custom_call.1} parent=1 // pred_fallthru
      _
    // Predicated region
    $region6: #{tpu_custom_call.1} parent=1 // pred_check
      _
    $region7: #{tpu_custom_call.1} parent=1 // pred_check_branch
      %22 = sbr.rel (0) target = $region9
    $region8: #{tpu_custom_call.1} parent=1 // pred_region
      %24 = vsyncadd [#allocation6], 0
      %s25 = sshll.u32 %s1, 4
      %s26 = int_to_ptr.hbm [resolvable:$true] %s25
      %s27 = sshll.u32 [#allocation5], 4
      %s28 = int_to_ptr.vmem [resolvable:$true] %s27
      %33 = dma.hbm_to_vmem [thread:$0]  %s26, 256, %s28, [#allocation6], 128, 128, 8
    $region9: #{tpu_custom_call.1} parent=1 // pred_fallthru
      _
    // Predicated region
    $region10: #{tpu_custom_call.1} parent=1 // pred_check
      _
    $region11: #{tpu_custom_call.1} parent=1 // pred_check_branch
      %35 = sbr.rel (0) target = $region13
    $region12: #{tpu_custom_call.1} parent=1 // pred_region
      %37 = dma.done [#allocation3], 128
    $region13: #{tpu_custom_call.1} parent=1 // pred_fallthru
      _
    // Predicated region
    $region14: #{tpu_custom_call.1} parent=1 // pred_check
      _
    $region15: #{tpu_custom_call.1} parent=1 // pred_check_branch
      %39 = sbr.rel (0) target = $region17
    $region16: #{tpu_custom_call.1} parent=1 // pred_region
      %41 = dma.done [#allocation6], 256
    $region17: #{tpu_custom_call.1} parent=1 // pred_fallthru
      _
    %p42 = scmp.eq.s32.totalorder 0, 0
    // Predicated region
    $region18: #{tpu_custom_call.1} parent=1 // pred_check
      %p43 = pneg %p42
    $region19: #{tpu_custom_call.1} parent=1 // pred_check_branch
      %45 = sbr.rel (%p43) target = $region21
    $region20: #{tpu_custom_call.1} parent=1 // pred_region
      %46 = vst [vmem:[#allocation7] sm:$0xff] 0.0
    $region21: #{tpu_custom_call.1} parent=1 // pred_fallthru
      _
    %v47 = vld [vmem:[#allocation2] sm:$0xff]
    %s48 = smul.u32 0, 16
    %s49 = scalar_lea.vmem [#allocation5], %s48
    %v50 = vld [vmem:[%s49] sm:$0xff]
    %v51 = vld [vmem:[%s49 + $0x8] sm:$0xff]
    %v52 = vld [vmem:[#allocation7] sm:$0xff]
    %vm53 = vcmask 130048
    %v55 = vsel %vm53, %v47, 0
    %57 = vmatpush.msra.mxu0 0.0
    %58 = vmatpush.msra.mxu0 0.0
    %59 = vmatpush.msra.mxu0 0.0
    %60 = vmatpush.msra.mxu0 0.0
    %61 = vmatpush.msra.mxu0 0.0
    %62 = vmatpush.msra.mxu0 0.0
    %63 = vmatpush.msra.mxu0 0.0
    %64 = vmatpush.msra.mxu0 0.0
    %65 = vmatpush.msra.mxu0 0.0
    %66 = vmatpush.msra.mxu0 0.0
    %67 = vmatpush.msra.mxu0 0.0
    %68 = vmatpush.msra.mxu0 0.0
    %69 = vmatpush.msra.mxu0 0.0
    %70 = vmatpush.msra.mxu0 0.0
    %71 = vmatpush.msra.mxu0 %v51
    %72 = vmatpush.msra.mxu0 %v50
    %73 = vmatmul.f32.gmra.mxu0 %v55
    %v74 = vpop.f32.mrf.mxu0
    %v75 = vadd.f32 0.0, %v74
    %76 = vdwg.mxu0
    %v77 = vadd.f32 %v52, %v75
    %78 = vst [vmem:[#allocation7] sm:$0xff] %v77
    // Predicated region
    $region22: #{tpu_custom_call.1} parent=1 // pred_check
      %p79 = pneg %p42
    $region23: #{tpu_custom_call.1} parent=1 // pred_check_branch
      %81 = sbr.rel (%p79) target = $region25
    $region24: #{tpu_custom_call.1} parent=1 // pred_region
      %v82 = vld [vmem:[#allocation7] sm:$0xff]
      %v83 = vlaneseq
      %v84 = vand.u32 %v83, 127
      %vm85 = vcmp.eq.s32.totalorder %v84, 32
      %v86 = vsel %vm85, %v82, 0.0
      %87 = vadd.xlane.f32.xlu0 %v86
      %v88 = vpop.xlane.xlu0 %87
      %vm89 = vcmp.lt.f32.partialorder %v88, 0.0
      %v90 = vmin.f32 %v88, -1e-12
      %v91 = vmax.f32 %v88, 1e-12
      %v92 = vsel %vm89, %v90, %v91
      %vm93 = vcmp.lt.s32.totalorder %v84, 32
      %v94 = vsel %vm93, %v82, 0.0
      %v95 = vrcp.pop %v92
      %v96 = vmul.f32 %v94, %v95
      %v97 = vmul.f32 %v96, %v96
      %98 = vadd.xlane.f32.xlu0 %v97
      %v99 = vpop.xlane.xlu0 %98
      %v100 = vmax.f32 %v99, 1e-24
      %v101 = vrsqrt.pop %v100
      %v102 = vmul.f32 %v101, %v100
      %v103 = vmul.f32 %v102, %v101
      %v104 = vmul.f32 0.5, %v103
      %v105 = vsub.f32 1.5, %v104
      %v106 = vmul.f32 %v101, %v105
      %vm107 = vweird.f32 %v100
      %vm108 = vweird.f32 %v101
      %vm109 = vmor %vm107, %vm108
      %v110 = vsel %vm109, %v101, %v106
      %v111 = vmul.f32 %v96, %v110
      %112 = vst [vmem:[#allocation7] sm:$0xff] %v111
    $region25: #{tpu_custom_call.1} parent=1 // pred_fallthru
      _
    // Predicated region
    $region26: #{tpu_custom_call.1} parent=1 // pred_check
      _
    $region27: #{tpu_custom_call.1} parent=1 // pred_check_branch
      %114 = sbr.rel (0) target = $region29
    $region28: #{tpu_custom_call.1} parent=1 // pred_region
      %116 = vsyncadd [#allocation4], 0
      %s118 = sshll.u32 [#allocation7], 4
      %s119 = int_to_ptr.vmem [resolvable:$true] %s118
      %s120 = sshll.u32 %s2, 4
      %s121 = int_to_ptr.hbm [resolvable:$true] %s120
      %123 = dma.vmem_to_hbm [thread:$0]  %s119, 128, %s121, [#allocation4]
    $region29: #{tpu_custom_call.1} parent=1 // pred_fallthru
      _
    // Predicated region
    $region30: #{tpu_custom_call.1} parent=1 // pred_check
      _
    $region31: #{tpu_custom_call.1} parent=1 // pred_check_branch
      %125 = sbr.rel (0) target = $region33
    $region32: #{tpu_custom_call.1} parent=1 // pred_region
      %127 = dma.done [#allocation4], 128
    $region33: #{tpu_custom_call.1} parent=1 // pred_fallthru
      _
    %128 = vsyncpa [#allocation3], 1
    %129 = vsyncpa [#allocation6], 1
    %130 = vsyncpa [#allocation4], 1

</llo_original>
